<compile_context>
chip_gen: v6e
topology: v6e:2x2x1
jax: 0.10.0
libtpu: 0.0.40
codegen_flags: <defaults>
</compile_context>

<pallas_src>
import math
import functools

import jax
import jax.numpy as jnp
from jax import lax
from jax.experimental import pallas as pl
from jax.experimental.pallas import tpu as pltpu


_TARGET_BLOCK_BYTES = 2 << 20            # ~2 MiB blocks: amortize ~0.35us/step
_VMEM_LIMIT_BYTES = 32 * 1024 * 1024     # double-buffered working set, all gens


def _make_pe(max_len: int, d_model: int) -> jnp.ndarray:
    """Replicates the PyTorch buffer construction; returns (max_len, d_model) f32."""
    position = jnp.arange(max_len, dtype=jnp.float32)[:, None]
    div_term = jnp.exp(
        jnp.arange(0, d_model, 2, dtype=jnp.float32) * (-math.log(10000.0) / d_model))
    angles = position * div_term
    pe = jnp.zeros((max_len, d_model), dtype=jnp.float32)
    pe = pe.at[:, 0::2].set(jnp.sin(angles))
    pe = pe.at[:, 1::2].set(jnp.cos(angles))
    return pe


# ----------------------- portable in-kernel dropout RNG -----------------------

def _hash32_py(x: int) -> int:
    """Python-side 32-bit finalizer used to pre-mix the user seed."""
    x &= 0xFFFFFFFF
    x ^= x >> 16
    x = (x * 0x7FEB352D) & 0xFFFFFFFF
    x ^= x >> 15
    x = (x * 0x846CA68B) & 0xFFFFFFFF
    x ^= x >> 16
    return x


def _keep_mask(g_u32, p: float):
    """Keep-mask from a 2-round xorshift-multiply hash of the element index."""
    h = g_u32
    h = h ^ (h >> jnp.uint32(16))
    h = h * jnp.uint32(0x7FEB352D)
    h = h ^ (h >> jnp.uint32(15))
    h = h * jnp.uint32(0x846CA68B)
    r = (h >> jnp.uint32(8)).astype(jnp.int32)           # top 24 bits, [0, 2^24)
    thresh = jnp.int32(int(round(p * float(1 << 24))))   # P(drop) == p
    return r >= thresh


def _dropout(y, g_u32, p: float):
    keep = _keep_mask(g_u32, p)
    scale = jnp.asarray(1.0 / (1.0 - p), dtype=y.dtype)
    return jnp.where(keep, y * scale, jnp.zeros_like(y))


# --------------------------------- kernels ------------------------------------

def _pe_kernel_flat(seed_ref, x_ref, pe_ref, o_ref, *, p, training, total_cols):
    # x_ref/o_ref: (bB, tC) block of the flattened (B, S*D) tensor at (b, c).
    # pe_ref:      (1, tC) block of the flattened (1, S*D) PE row at column c
    #              (index_map ignores the batch axis -> resident over batch).
    y = x_ref[...] + pe_ref[...]
    if training and 0.0 < p < 1.0:
        c = pl.program_id(0)
        b = pl.program_id(1)
        bB, tC = y.shape
        rows = lax.broadcasted_iota(jnp.int32, (bB, 1), 0).astype(jnp.uint32)
        cols = lax.broadcasted_iota(jnp.int32, (1, tC), 1).astype(jnp.uint32)
        row_term = (((b * bB).astype(jnp.uint32) + rows) * jnp.uint32(total_cols)
                    + (c * tC).astype(jnp.uint32)
                    + seed_ref[0].astype(jnp.uint32))
        g = row_term + cols                      # unique per valid element
        y = _dropout(y, g, p)
    o_ref[...] = y.astype(o_ref.dtype)


def _pe_kernel_seq(seed_ref, x_ref, pe_ref, o_ref, *, p, training, reps, total_cols):
    # x_ref/o_ref: (tS, reps*D) block of the flattened (S, B*D) tensor at (s, g).
    # pe_ref:      (tS, D) PE block at seq tile s (resident across batch groups);
    #              replicated across the `reps` batch columns once per block.
    y = x_ref[...] + jnp.tile(pe_ref[...], (1, reps))
    if training and 0.0 < p < 1.0:
        s = pl.program_id(0)
        gb = pl.program_id(1)
        tS, tC = y.shape
        rows = lax.broadcasted_iota(jnp.int32, (tS, 1), 0).astype(jnp.uint32)
        cols = lax.broadcasted_iota(jnp.int32, (1, tC), 1).astype(jnp.uint32)
        row_term = (((s * tS).astype(jnp.uint32) + rows) * jnp.uint32(total_cols)
                    + (gb * tC).astype(jnp.uint32)
                    + seed_ref[0].astype(jnp.uint32))
        g = row_term + cols
        y = _dropout(y, g, p)
    o_ref[...] = y.astype(o_ref.dtype)


# ----------------------------- tiling heuristics ------------------------------

def _round_up(x: int, m: int) -> int:
    return ((x + m - 1) // m) * m


def _flat_tiles(rows: int, cols: int, dtype_bytes: int, target_bytes: int):
    """(row_block, col_tile) for a (rows, cols) slab.  Blocks are multiples of
    (8, 128) (or full extent); cdiv grids mask the ragged tails, so there is
    never a whole-array fallback block."""
    row_est = rows if rows < 8 else 8
    if cols <= 128:
        t_c = cols
    else:
        cap_c = max(128, (target_bytes // (row_est * dtype_bytes)) // 128 * 128)
        t_c = min(_round_up(cols, 128), cap_c)
    if rows <= 8:
        b_r = rows
    else:
        cap_r = max(8, (target_bytes // max(1, t_c * dtype_bytes)) // 8 * 8)
        b_r = min(_round_up(rows, 8), cap_r)
    # Ensure >=2 blocks along a parallel axis for v7x's second TensorCore
    # whenever the tensor is big enough for the split to be worth it.
    if pl.cdiv(rows, b_r) * pl.cdiv(cols, t_c) == 1:
        if rows > 8:
            b_r = max(8, _round_up(pl.cdiv(rows, 2), 8))
        elif cols > 256:
            t_c = max(128, _round_up(pl.cdiv(cols, 2), 128))
    return b_r, t_c


def _seq_tiles(S: int, B: int, D: int, dtype_bytes: int, target_bytes: int):
    """(seq_rows_per_block, batches_per_col_group) for the (S, B*D) view."""
    row_bytes = B * D * dtype_bytes
    if 8 * row_bytes <= 2 * target_bytes:
        n_b = B                                   # full-extent columns (always legal)
    else:
        unit = 128 // math.gcd(D, 128)            # keeps n_b*D a multiple of 128
        n_b = max(unit, (target_bytes // max(1, 8 * D * dtype_bytes)) // unit * unit)
        n_b = min(n_b, B)
    t_cols = n_b * D
    if S <= 8:
        t_s = S
    else:
        cap_s = max(8, (target_bytes // max(1, t_cols * dtype_bytes)) // 8 * 8)
        t_s = min(_round_up(S, 8), cap_s)
    if pl.cdiv(S, t_s) * pl.cdiv(B, n_b) == 1 and S > 8:
        t_s = max(8, _round_up(pl.cdiv(S, 2), 8))
    return t_s, n_b


# --------------------------------- wrapper ------------------------------------

def positional_encoding_forward(
    x: jnp.ndarray,
    pe: jnp.ndarray,
    *,
    p: float = 0.1,
    training: bool = True,
    batch_first: bool = True,
    seed: int = 0,
) -> jnp.ndarray:
    """Forward of the PyTorch PositionalEncoding module.

    x: (B, S, D) if batch_first else (S, B, D).  pe: (max_len, D).
    # TODO(synk): PyTorch's exact dropout RNG stream is not reproducible; this is
    # statistically-equivalent inverted dropout driven by a counter hash.
    """
    p = float(p)
    training = bool(training)
    if training and p >= 1.0:
        return jnp.zeros_like(x)

    dtype_bytes = jnp.dtype(x.dtype).itemsize
    seed_arr = jnp.asarray([_hash32_py(int(seed)) & 0x7FFFFFFF], dtype=jnp.int32)
    cparams = pltpu.CompilerParams(
        dimension_semantics=("parallel", "parallel"),
        vmem_limit_bytes=_VMEM_LIMIT_BYTES)

    if batch_first:
        B, S, D = x.shape
        C = S * D
        x2 = x.reshape(B, C)                              # contiguous merge: free
        pe2 = pe[:S, :].reshape(1, C).astype(x.dtype)     # compute in x.dtype
        bB, tC = _flat_tiles(B, C, dtype_bytes, _TARGET_BLOCK_BYTES)
        grid = (pl.cdiv(C, tC), pl.cdiv(B, bB))           # cols OUTER, batch INNER
        kernel = functools.partial(_pe_kernel_flat, p=p, training=training,
                                   total_cols=C)
        out2 = pl.pallas_call(
            kernel,
            out_shape=jax.ShapeDtypeStruct((B, C), x.dtype),
            grid_spec=pltpu.PrefetchScalarGridSpec(
                num_scalar_prefetch=1,                    # seed lands in SMEM
                grid=grid,
                in_specs=[
                    pl.BlockSpec((bB, tC), lambda c, b, _s: (b, c)),   # x
                    pl.BlockSpec((1, tC), lambda c, b, _s: (0, c)),    # pe (resident)
                ],
                out_specs=pl.BlockSpec((bB, tC), lambda c, b, _s: (b, c)),
            ),
            compiler_params=cparams,
            cost_estimate=pl.CostEstimate(
                flops=x.size, transcendentals=0,
                bytes_accessed=2 * x.size * dtype_bytes + C * dtype_bytes),
        )(seed_arr, x2, pe2)
        return out2.reshape(B, S, D)

    # batch_first=False: lane-dense (S, B*D) view of the native layout
    # (no wrapper transposes of a bandwidth-bound tensor).
    S, B, D = x.shape
    C = B * D
    x2 = x.reshape(S, C)                                  # contiguous merge: free
    pe2 = pe[:S, :].astype(x.dtype)                       # (S, D)
    tS, nB = _seq_tiles(S, B, D, dtype_bytes, _TARGET_BLOCK_BYTES)
    grid = (pl.cdiv(S, tS), pl.cdiv(B, nB))               # seq OUTER, batch INNER
    kernel = functools.partial(_pe_kernel_seq, p=p, training=training,
                               reps=nB, total_cols=C)
    out2 = pl.pallas_call(
        kernel,
        out_shape=jax.ShapeDtypeStruct((S, C), x.dtype),
        grid_spec=pltpu.PrefetchScalarGridSpec(
            num_scalar_prefetch=1,
            grid=grid,
            in_specs=[
                pl.BlockSpec((tS, nB * D), lambda s, g, _s: (s, g)),   # x
                pl.BlockSpec((tS, D), lambda s, g, _s: (s, 0)),        # pe (resident)
            ],
            out_specs=pl.BlockSpec((tS, nB * D), lambda s, g, _s: (s, g)),
        ),
        compiler_params=cparams,
        cost_estimate=pl.CostEstimate(
            flops=x.size, transcendentals=0,
            bytes_accessed=2 * x.size * dtype_bytes + S * D * dtype_bytes),
    )(seed_arr, x2, pe2)
    return out2.reshape(S, B, D)


if __name__ == "__main__":
    # Small shapes consistent with the module: batch=2, seq=8, d_model=32.
    B, S, D = 2, 8, 32
    max_len = 64
    p = 0.1

    key = jax.random.PRNGKey(0)
    x = jax.random.normal(key, (B, S, D), dtype=jnp.float32)
    pe = _make_pe(max_len, D)
    ref = x + pe[None, :S, :]

    # Eval mode (dropout = identity): exact match against the pure-JAX reference.
    out_eval = jax.block_until_ready(
        positional_encoding_forward(x, pe, p=p, training=False))
    assert out_eval.shape == (B, S, D)
    assert jnp.allclose(out_eval, ref, atol=1e-6), "eval-mode mismatch"

    # batch_first=False path (native (S, B, D) layout via lane-dense (S, B*D) view).
    x_sf = jnp.transpose(x, (1, 0, 2))
    out_sf = jax.block_until_ready(
        positional_encoding_forward(x_sf, pe, p=p, training=False, batch_first=False))
    assert jnp.allclose(out_sf, jnp.transpose(ref, (1, 0, 2)), atol=1e-6), \
        "seq-first eval-mode mismatch"

    # bf16 path (compute stays in bf16).
    out_bf16 = jax.block_until_ready(
        positional_encoding_forward(x.astype(jnp.bfloat16), pe, p=p, training=False))
    assert out_bf16.dtype == jnp.bfloat16
    assert jnp.allclose(out_bf16.astype(jnp.float32), ref, atol=5e-2), "bf16 mismatch"

    # Training mode (inverted dropout, deterministic counter-hash RNG).
    out_train = jax.block_until_ready(
        positional_encoding_forward(x, pe, p=p, training=True, seed=1234))
    assert out_train.shape == (B, S, D)
    assert bool(jnp.all(jnp.isfinite(out_train)))
    # Every element is either dropped (exact 0) or scaled by exactly 1/(1-p).
    scaled_ok = jnp.abs(out_train * (1.0 - p) - ref) < 1e-5
    dropped = jnp.abs(out_train) < 1e-12
    assert bool(jnp.all(scaled_ok | dropped)), "dropout semantics mismatch"

    # Training mode on the seq-first path as well.
    out_train_sf = jax.block_until_ready(
        positional_encoding_forward(x_sf, pe, p=p, training=True, seed=7,
                                    batch_first=False))
    ref_sf = jnp.transpose(ref, (1, 0, 2))
    scaled_ok = jnp.abs(out_train_sf * (1.0 - p) - ref_sf) < 1e-5
    dropped = jnp.abs(out_train_sf) < 1e-12
    assert bool(jnp.all(scaled_ok | dropped)), "seq-first dropout semantics mismatch"

    print("KERNEL_OK")
</pallas_src>

<mosaic_0001>
module attributes {stable_mosaic.version = 11 : i64} {
  func.func @_pe_kernel_flat(%arg0: i32, %arg1: i32, %arg2: memref<1xi32, #tpu.memory_space<smem>>, %arg3: memref<2x256xf32, #tpu.memory_space<vmem>>, %arg4: memref<1x256xf32, #tpu.memory_space<vmem>>, %arg5: memref<2x256xf32, #tpu.memory_space<vmem>>) attributes {dimension_semantics = [#tpu.dimension_semantics<parallel>, #tpu.dimension_semantics<parallel>], iteration_bounds = array<i64: 1, 1>, scalar_prefetch = 1 : i64, scratch_operands = 0 : i64, tpu.core_type = #tpu.core_type<tc>, window_params = [{transform_indices = @transform_0, window_bounds = array<i64: 2, 256>}, {transform_indices = @transform_1, window_bounds = array<i64: 1, 256>}, {transform_indices = @transform_2, window_bounds = array<i64: 2, 256>}]} {
    %c0 = arith.constant 0 : index
    %c0_0 = arith.constant 0 : index
    %0 = vector.load %arg3[%c0, %c0_0] : memref<2x256xf32, #tpu.memory_space<vmem>>, vector<2x256xf32>
    %c0_1 = arith.constant 0 : index
    %c0_2 = arith.constant 0 : index
    %1 = vector.load %arg4[%c0_1, %c0_2] : memref<1x256xf32, #tpu.memory_space<vmem>>, vector<1x256xf32>
    %2 = vector.broadcast %1 : vector<1x256xf32> to vector<2x256xf32>
    %3 = arith.addf %0, %2 : vector<2x256xf32>
    %c0_3 = arith.constant 0 : index
    %c0_4 = arith.constant 0 : index
    %4 = vector.load %arg5[%c0_3, %c0_4] : memref<2x256xf32, #tpu.memory_space<vmem>>, vector<2x256xf32>
    tpu.vector_store %arg5[%c0_3, %c0_4], %3 {strides = array<i32>} : memref<2x256xf32, #tpu.memory_space<vmem>>, vector<2x256xf32>,
    return
  }
  func.func @transform_0(%arg0: i32, %arg1: i32, %arg2: memref<1xi32, #tpu.memory_space<smem>>) -> (i32, i32) {
    %c0_i32 = arith.constant 0 : i32
    return %arg1, %arg0 : i32, i32
  }
  func.func @transform_1(%arg0: i32, %arg1: i32, %arg2: memref<1xi32, #tpu.memory_space<smem>>) -> (i32, i32) {
    %c0_i32 = arith.constant 0 : i32
    %c0_i32_0 = arith.constant 0 : i32
    return %c0_i32, %arg0 : i32, i32
  }
  func.func @transform_2(%arg0: i32, %arg1: i32, %arg2: memref<1xi32, #tpu.memory_space<smem>>) -> (i32, i32) {
    %c0_i32 = arith.constant 0 : i32
    return %arg1, %arg0 : i32, i32
  }
}

</mosaic_0001>

<llo_original>
// kernel: tpu_custom_call.1
$region0: #{tpu_custom_call.1}
  #allocation0 [shape = 'u32[]', space=smem, size = 0x4, offset = 0x4, fixed_abs, tag = 'smem constant byte address 0x4 - core index']
  #allocation1 [shape = 'u32[144,128]{1,0:T(1,128)}', space=vmem, size = 0x12000, scoped, tag = 'internal scratch']
  #allocation2 [shape = 's32[1]{0}', space=sflag, size = 0x4, scoped, tag = 'scoped memory for tpu_custom_call.1']
  #allocation3 [shape = 's32[1]{0:T(128)S(6)}', space=smem, size = 0x200, scoped, tag = 'prefetched SMEM operand 0']
  %s0 = inlined_call_operand.<no memory space> [shape: s32[1], index: 0, kind: input, shape index: {}]
  %s1 = inlined_call_operand.hbm [shape: f32[2,256], index: 1, kind: input, shape index: {}]
  %s2 = inlined_call_operand.vmem [shape: f32[1,256], index: 2, kind: input, shape index: {}]
  %s3 = inlined_call_operand.hbm [shape: f32[2,256], index: 3, kind: output, shape index: {}]
  %s4 = sld [smem:[#allocation0]]
  $region22: #{tpu_custom_call.1} parent=0
    _
  %s6 = ssub.s32 1, %s4
  %s7 = scalar_select 0, %s6, %s4
  %8 = sst [smem:[#allocation3]] %s0
  $region1: #{tpu_custom_call.1} parent=0
    #allocation4 [shape = 'u8[2048]{0}', space=vmem, size = 0x800, scoped, tag = 'input window, operand 1, single buffered']
    #allocation5 [shape = 's32[1]{0}', space=sflag, size = 0x4, scoped, tag = 'scoped memory for tpu_custom_call.1']
    #allocation6 [shape = 's32[1]{0}', space=sflag, size = 0x4, scoped, tag = 'scoped memory for tpu_custom_call.1']
    #allocation7 [shape = 'u8[2048]{0}', space=vmem, size = 0x800, scoped, tag = 'output window, operand 0, single buffered']
    %9 = vsyncpa [#allocation5], 0
    %10 = vsyncpa [#allocation6], 0
    // Predicated region
    $region2: #{tpu_custom_call.1} parent=1 // pred_check
      _
    $region3: #{tpu_custom_call.1} parent=1 // pred_check_branch
      %12 = sbr.rel (0) target = $region5
    $region4: #{tpu_custom_call.1} parent=1 // pred_region
      %s14 = ssub.s32 64, 64
      %15 = vsyncadd [#allocation5], %s14
      %s17 = sshll.u32 [#allocation4], 4
      %s18 = int_to_ptr.vmem [resolvable:$true] %s17
      %20 = dma.hbm_to_vmem [thread:$0]  %s1, 64, %s18, [#allocation5]
    $region5: #{tpu_custom_call.1} parent=1 // pred_fallthru
      _
    // Predicated region
    $region6: #{tpu_custom_call.1} parent=1 // pred_check
      _
    $region7: #{tpu_custom_call.1} parent=1 // pred_check_branch
      %22 = sbr.rel (0) target = $region9
    $region8: #{tpu_custom_call.1} parent=1 // pred_region
      _
    $region9: #{tpu_custom_call.1} parent=1 // pred_fallthru
      _
    // Predicated region
    $region10: #{tpu_custom_call.1} parent=1 // pred_check
      _
    $region11: #{tpu_custom_call.1} parent=1 // pred_check_branch
      %24 = sbr.rel (0) target = $region13
    $region12: #{tpu_custom_call.1} parent=1 // pred_region
      %25 = dma.done [#allocation5], 64
    $region13: #{tpu_custom_call.1} parent=1 // pred_fallthru
      _
    %v26 = vld [vmem:[#allocation4] sm:$0xf]
    %v27 = vld [vmem:[%s2] sm:$0x3]
    %v29 = vlaneseq
    %v30 = vshrl.u32 %v29, 7
    %v31 = vsub.s32 0, %v30
    %v32 = vrot.slane %v27, %v31
    %v33 = vlaneseq
    %v34 = vshrl.u32 %v33, 7
    %v35 = vsub.s32 1, %v34
    %v36 = vrot.slane %v27, %v35
    %v37 = vcombine.low %v32, %v36
    %v39 = vunpack.c.l.s4 1983009808
    %v40 = vunpack.c.0.s8 %v39
    %v41 = vlaneseq
    %v42 = vshrl.u32 %v41, 7
    %v43 = vsub.s32 %v40, %v42
    %v44 = vrot.slane %v37, %v43
    %v46 = vadd.f32 %v26, %v44
    %47 = vst [vmem:[#allocation7] sm:$0xf] %v46
    // Predicated region
    $region14: #{tpu_custom_call.1} parent=1 // pred_check
      _
    $region15: #{tpu_custom_call.1} parent=1 // pred_check_branch
      %49 = sbr.rel (0) target = $region17
    $region16: #{tpu_custom_call.1} parent=1 // pred_region
      %s51 = ssub.s32 64, 64
      %52 = vsyncadd [#allocation6], %s51
      %s54 = sshll.u32 [#allocation7], 4
      %s55 = int_to_ptr.vmem [resolvable:$true] %s54
      %57 = dma.vmem_to_hbm [thread:$0]  %s55, 64, %s3, [#allocation6]
    $region17: #{tpu_custom_call.1} parent=1 // pred_fallthru
      _
    // Predicated region
    $region18: #{tpu_custom_call.1} parent=1 // pred_check
      _
    $region19: #{tpu_custom_call.1} parent=1 // pred_check_branch
      %59 = sbr.rel (0) target = $region21
    $region20: #{tpu_custom_call.1} parent=1 // pred_region
      %60 = dma.done [#allocation6], 64
    $region21: #{tpu_custom_call.1} parent=1 // pred_fallthru
      _
    %61 = vsyncpa [#allocation5], 1
    %62 = vsyncpa [#allocation6], 1

</llo_original>
